<compile_context>
chip_gen: v5e
topology: v5e:2x2
jax: 0.10.0
libtpu: 0.0.40
codegen_flags: <defaults>
</compile_context>

<pallas_src>
import jax
import jax.numpy as jnp
from jax.experimental import pallas as pl
from jax.experimental.pallas import tpu as pltpu


# ----------------------------------------------------------------------------
# Kernels
# ----------------------------------------------------------------------------
def _scale_kernel(scale_ref, x_ref, o_ref):
    # scale_ref: (tile_b, 1) f32; x_ref/o_ref: (tile_b, tile_n).
    # Multiply in f32 (VPU has slack; matches PyTorch's div-by-keep_prob more
    # closely for bf16/fp16 inputs), cast on store.
    o_ref[...] = (x_ref[...].astype(jnp.float32) * scale_ref[...]).astype(o_ref.dtype)


def _scale_add_kernel(scale_ref, x_ref, r_ref, o_ref):
    # Fused residual: o = residual + x * scale.
    o_ref[...] = (
        r_ref[...].astype(jnp.float32)
        + x_ref[...].astype(jnp.float32) * scale_ref[...]
    ).astype(o_ref.dtype)


# ----------------------------------------------------------------------------
# Tiling heuristics
# ----------------------------------------------------------------------------
def _generation_targets():
    """(target block bytes, vmem_limit_bytes) chosen per TPU generation."""
    kind = ""
    try:
        kind = jax.devices()[0].device_kind.lower()
    except Exception:
        pass
    if "v7" in kind:
        # ~3.2 TB/s HBM, 64 MiB VMEM/TC: bigger blocks to amortize per-step
        # overhead; 4 x 8 MiB double-buffered = 32 MiB < 48 MiB scoped limit.
        return 8 << 20, 48 << 20
    if "v5 lite" in kind or "v5e" in kind or "v5lite" in kind:
        # ~0.8 TB/s HBM: 2 MiB already ~85% of roofline; stay inside the
        # 16 MiB default scoped VMEM (4 x 2 MiB = 8 MiB).
        return 2 << 20, 16 << 20
    # v6e / unknown: measured mem-bound plateau at 2-4 MiB blocks.
    return 4 << 20, 32 << 20


def _choose_tiles(B, N, itemsize, target_bytes):
    """Pick (tile_b, tile_n) obeying the (8, 128) BlockSpec rule:
    each of the last two block dims is either the full extent or a multiple
    of 8 / 128 respectively, with block bytes <= target_bytes."""
    total_bytes = B * N * itemsize
    if total_bytes <= target_bytes:
        return B, N  # whole array in one lane-dense block

    tile_b = B if B < 8 else 8
    lanes = max(1, target_bytes // (tile_b * itemsize))
    tile_n = (lanes // 128) * 128
    if tile_n < 128:
        tile_n = 128
    if tile_n >= N:
        # Full rows fit within the target: stack more rows per block.
        tile_n = N
        rows = max(1, target_bytes // max(1, N * itemsize))
        if rows >= B:
            tile_b = B
        elif B >= 8:
            tile_b = min(B, max(8, (rows // 8) * 8))
        # else: B < 8 -> tile_b stays B (full extent)
    return tile_b, tile_n


# ----------------------------------------------------------------------------
# Wrapper
# ----------------------------------------------------------------------------
def drop_path(x, drop_prob: float = 0.0, training: bool = False, *,
              key=None, seed: int = 0, residual=None, target_bytes=None):
    """Stochastic Depth per sample. If `residual` is given, returns
    residual + drop_path(x) fused in the same kernel.

    NOTE: unlike PyTorch's global RNG, the mask is derived from `key` (or
    PRNGKey(seed) if key is None). Thread a fresh key per call/layer.
    """
    if drop_prob == 0.0 or not training:
        return x if residual is None else residual + x

    keep_prob = 1.0 - drop_prob
    B = x.shape[0]
    N = 1
    for d in x.shape[1:]:
        N *= int(d)
    N = max(N, 1)
    flat = x.reshape(B, N)

    # Per-sample keep decisions + scale, precomputed in plain JAX (hoisted out
    # of the kernel hot loop).
    if key is None:
        key = jax.random.PRNGKey(seed)
    keep = jax.random.bernoulli(key, keep_prob, (B,))
    scale = (keep.astype(jnp.float32) / jnp.float32(keep_prob)).reshape(B, 1)

    itemsize = jnp.dtype(flat.dtype).itemsize
    gen_target, vmem_limit = _generation_targets()
    if target_bytes is None:
        target_bytes = gen_target
    tile_b, tile_n = _choose_tiles(B, N, itemsize, int(target_bytes))
    grid = (pl.cdiv(B, tile_b), pl.cdiv(N, tile_n))

    x_spec = pl.BlockSpec((tile_b, tile_n), lambda bi, ni: (bi, ni))
    s_spec = pl.BlockSpec((tile_b, 1), lambda bi, ni: (bi, 0))

    if residual is None:
        kernel = _scale_kernel
        inputs = (scale, flat)
        in_specs = [s_spec, x_spec]
        flops = flat.size
        bytes_accessed = 2 * flat.size * itemsize + scale.size * 4
    else:
        assert residual.shape == x.shape, "residual must match x's shape"
        kernel = _scale_add_kernel
        r_flat = residual.reshape(B, N)
        inputs = (scale, flat, r_flat)
        in_specs = [s_spec, x_spec, x_spec]
        flops = 2 * flat.size
        bytes_accessed = (2 * flat.size * itemsize
                          + r_flat.size * jnp.dtype(r_flat.dtype).itemsize
                          + scale.size * 4)

    out = pl.pallas_call(
        kernel,
        out_shape=jax.ShapeDtypeStruct((B, N), x.dtype),
        grid=grid,
        in_specs=in_specs,
        out_specs=x_spec,
        compiler_params=pltpu.CompilerParams(
            dimension_semantics=("parallel", "parallel"),
            vmem_limit_bytes=vmem_limit,
        ),
        cost_estimate=pl.CostEstimate(
            flops=flops, transcendentals=0, bytes_accessed=bytes_accessed),
    )(*inputs)
    return out.reshape(x.shape)


class DropPath:
    """Drop paths (Stochastic Depth) per sample."""

    def __init__(self, drop_prob=None):
        self.drop_prob = 0.0 if drop_prob is None else float(drop_prob)
        self.training = True

    def __call__(self, x, key=None, seed: int = 0, residual=None):
        return drop_path(x, self.drop_prob, self.training,
                         key=key, seed=seed, residual=residual)


# ----------------------------------------------------------------------------
# Self-test
# ----------------------------------------------------------------------------
if __name__ == "__main__":
    root = jax.random.PRNGKey(0)
    kx, kmask, kres, kx2, kmask2 = jax.random.split(root, 5)

    # Small shape consistent with the module's usage.
    x = jax.random.normal(kx, (2, 4, 16, 16), dtype=jnp.float32)

    drop_prob = 0.25
    keep_prob = 1.0 - drop_prob
    module = DropPath(drop_prob=drop_prob)
    module.training = True

    out = jax.block_until_ready(module(x, key=kmask))
    keep_ref = jax.random.bernoulli(kmask, keep_prob, (x.shape[0],))
    expect = jnp.where(keep_ref.reshape(-1, 1, 1, 1), x / keep_prob, 0.0)
    assert bool(jnp.allclose(out, expect, atol=1e-5, rtol=1e-5)), "basic path mismatch"

    # Fused residual variant: y = residual + drop_path(x).
    r = jax.random.normal(kres, x.shape, dtype=jnp.float32)
    out_fused = jax.block_until_ready(module(x, key=kmask, residual=r))
    assert bool(jnp.allclose(out_fused, r + expect, atol=1e-5, rtol=1e-5)), \
        "fused residual path mismatch"

    # Eval mode: identity.
    module.training = False
    out_eval = jax.block_until_ready(module(x))
    assert bool(jnp.allclose(out_eval, x)), "eval mode should be identity"

    # Exercise the multi-block / partial-block tiling path with a forced
    # small block target (B=10 not a multiple of 8, N=4130 not a multiple of 128).
    x2 = jax.random.normal(kx2, (10, 5, 7, 118), dtype=jnp.float32)
    p2 = 0.5
    out2 = jax.block_until_ready(
        drop_path(x2, p2, True, key=kmask2, target_bytes=64 * 1024))
    keep2 = jax.random.bernoulli(kmask2, 1.0 - p2, (x2.shape[0],))
    expect2 = jnp.where(keep2.reshape(-1, 1, 1, 1), x2 / (1.0 - p2), 0.0)
    assert bool(jnp.allclose(out2, expect2, atol=1e-5, rtol=1e-5)), \
        "tiled path mismatch"

    print("KERNEL_OK")
</pallas_src>

<mosaic_0001>
module attributes {stable_mosaic.version = 11 : i64} {
  func.func @_scale_kernel(%arg0: i32, %arg1: i32, %arg2: memref<2x1xf32, #tpu.memory_space<vmem>>, %arg3: memref<2x1024xf32, #tpu.memory_space<vmem>>, %arg4: memref<2x1024xf32, #tpu.memory_space<vmem>>) attributes {dimension_semantics = [#tpu.dimension_semantics<parallel>, #tpu.dimension_semantics<parallel>], iteration_bounds = array<i64: 1, 1>, scalar_prefetch = 0 : i64, scratch_operands = 0 : i64, tpu.core_type = #tpu.core_type<tc>, window_params = [{transform_indices = @transform_0, window_bounds = array<i64: 2, 1>}, {transform_indices = @transform_1, window_bounds = array<i64: 2, 1024>}, {transform_indices = @transform_2, window_bounds = array<i64: 2, 1024>}]} {
    %c0 = arith.constant 0 : index
    %c0_0 = arith.constant 0 : index
    %0 = vector.load %arg3[%c0, %c0_0] : memref<2x1024xf32, #tpu.memory_space<vmem>>, vector<2x1024xf32>
    %c0_1 = arith.constant 0 : index
    %c0_2 = arith.constant 0 : index
    %1 = vector.load %arg2[%c0_1, %c0_2] : memref<2x1xf32, #tpu.memory_space<vmem>>, vector<2x1xf32>
    %2 = vector.broadcast %1 : vector<2x1xf32> to vector<2x1024xf32>
    %3 = arith.mulf %0, %2 : vector<2x1024xf32>
    %c0_3 = arith.constant 0 : index
    %c0_4 = arith.constant 0 : index
    %4 = vector.load %arg4[%c0_3, %c0_4] : memref<2x1024xf32, #tpu.memory_space<vmem>>, vector<2x1024xf32>
    tpu.vector_store %arg4[%c0_3, %c0_4], %3 {strides = array<i32>} : memref<2x1024xf32, #tpu.memory_space<vmem>>, vector<2x1024xf32>,
    return
  }
  func.func @transform_0(%arg0: i32, %arg1: i32) -> (i32, i32) {
    %c0_i32 = arith.constant 0 : i32
    %c0_i32_0 = arith.constant 0 : i32
    return %arg0, %c0_i32 : i32, i32
  }
  func.func @transform_1(%arg0: i32, %arg1: i32) -> (i32, i32) {
    %c0_i32 = arith.constant 0 : i32
    return %arg0, %arg1 : i32, i32
  }
  func.func @transform_2(%arg0: i32, %arg1: i32) -> (i32, i32) {
    %c0_i32 = arith.constant 0 : i32
    return %arg0, %arg1 : i32, i32
  }
}

</mosaic_0001>

<llo_original>
// kernel: tpu_custom_call.1
$region0: #{tpu_custom_call.1}
  #allocation0 [shape = 'u32[]', space=smem, size = 0x4, offset = 0x4, fixed_abs, tag = 'smem constant byte address 0x4 - core index']
  #allocation1 [shape = 'u32[72,128]{1,0:T(1,128)}', space=vmem, size = 0x9000, scoped, tag = 'internal scratch']
  %s0 = inlined_call_operand.vmem [shape: f32[2,1], index: 0, kind: input, shape index: {}]
  %s1 = inlined_call_operand.hbm [shape: f32[2,1024], index: 1, kind: input, shape index: {}]
  %s2 = inlined_call_operand.hbm [shape: f32[2,1024], index: 2, kind: output, shape index: {}]
  %s3 = sld [smem:[#allocation0]]
  $region22: #{tpu_custom_call.1} parent=0
    _
  %s5 = ssub.s32 1, %s3
  %s6 = scalar_select 0, %s5, %s3
  $region1: #{tpu_custom_call.1} parent=0
    #allocation2 [shape = 'u8[8192]{0}', space=vmem, size = 0x2000, scoped, tag = 'input window, operand 1, single buffered']
    #allocation3 [shape = 's32[1]{0}', space=sflag, size = 0x4, scoped, tag = 'scoped memory for tpu_custom_call.1']
    #allocation4 [shape = 's32[1]{0}', space=sflag, size = 0x4, scoped, tag = 'scoped memory for tpu_custom_call.1']
    #allocation5 [shape = 'u8[8192]{0}', space=vmem, size = 0x2000, scoped, tag = 'output window, operand 0, single buffered']
    %7 = vsyncpa [#allocation3], 0
    %8 = vsyncpa [#allocation4], 0
    // Predicated region
    $region2: #{tpu_custom_call.1} parent=1 // pred_check
      _
    $region3: #{tpu_custom_call.1} parent=1 // pred_check_branch
      %10 = sbr.rel (0) target = $region5
    $region4: #{tpu_custom_call.1} parent=1 // pred_region
      _
    $region5: #{tpu_custom_call.1} parent=1 // pred_fallthru
      _
    // Predicated region
    $region6: #{tpu_custom_call.1} parent=1 // pred_check
      _
    $region7: #{tpu_custom_call.1} parent=1 // pred_check_branch
      %12 = sbr.rel (0) target = $region9
    $region8: #{tpu_custom_call.1} parent=1 // pred_region
      %14 = vsyncadd [#allocation3], 0
      %s16 = sshll.u32 %s1, 4
      %s17 = int_to_ptr.hbm [resolvable:$true] %s16
      %s18 = sshll.u32 [#allocation2], 4
      %s19 = int_to_ptr.vmem [resolvable:$true] %s18
      %21 = dma.hbm_to_vmem [thread:$0]  %s17, 256, %s19, [#allocation3]
    $region9: #{tpu_custom_call.1} parent=1 // pred_fallthru
      _
    // Predicated region
    $region10: #{tpu_custom_call.1} parent=1 // pred_check
      _
    $region11: #{tpu_custom_call.1} parent=1 // pred_check_branch
      %23 = sbr.rel (0) target = $region13
    $region12: #{tpu_custom_call.1} parent=1 // pred_region
      %25 = dma.done [#allocation3], 256
    $region13: #{tpu_custom_call.1} parent=1 // pred_fallthru
      _
    %v26 = vld [vmem:[#allocation2] sm:$0xff]
    %v27 = vld [vmem:[#allocation2 + $0x8] sm:$0xff]
    %v28 = vld [vmem:[%s0] sm:$0x3]
    %30 = vset.pattern.permute.xlu0 0
    %31 = vperm.xlu0 %30, %v28
    %v32 = vpop.permute.xlu0 %31
    %v34 = vunpack.c.l.s4 269488144
    %v35 = vunpack.c.0.s8 %v34
    %v36 = vperm.slane %v32, %v35
    %v38 = vmul.f32 %v26, %v36
    %v39 = vmul.f32 %v27, %v36
    %40 = vst [vmem:[#allocation5] sm:$0xff] %v38
    %41 = vst [vmem:[#allocation5 + $0x8] sm:$0xff] %v39
    // Predicated region
    $region14: #{tpu_custom_call.1} parent=1 // pred_check
      _
    $region15: #{tpu_custom_call.1} parent=1 // pred_check_branch
      %43 = sbr.rel (0) target = $region17
    $region16: #{tpu_custom_call.1} parent=1 // pred_region
      %45 = vsyncadd [#allocation4], 0
      %s47 = sshll.u32 [#allocation5], 4
      %s48 = int_to_ptr.vmem [resolvable:$true] %s47
      %s49 = sshll.u32 %s2, 4
      %s50 = int_to_ptr.hbm [resolvable:$true] %s49
      %52 = dma.vmem_to_hbm [thread:$0]  %s48, 256, %s50, [#allocation4]
    $region17: #{tpu_custom_call.1} parent=1 // pred_fallthru
      _
    // Predicated region
    $region18: #{tpu_custom_call.1} parent=1 // pred_check
      _
    $region19: #{tpu_custom_call.1} parent=1 // pred_check_branch
      %54 = sbr.rel (0) target = $region21
    $region20: #{tpu_custom_call.1} parent=1 // pred_region
      %56 = dma.done [#allocation4], 256
    $region21: #{tpu_custom_call.1} parent=1 // pred_fallthru
      _
    %57 = vsyncpa [#allocation3], 1
    %58 = vsyncpa [#allocation4], 1

</llo_original>
